<compile_context>
chip_gen: v7x
topology: tpu7x:2x2x1
jax: 0.10.0
libtpu: 0.0.40
codegen_flags: <defaults>
</compile_context>

<pallas_src>
import jax
import jax.numpy as jnp
from jax.experimental import pallas as pl
from jax.experimental.pallas import tpu as pltpu

HIDDEN = 32          # hidden_X_dim (small synthetic size; module default is 256)
B, L = 2, 8          # batch, sequence length
OUT_PAD = 128        # lane-dense padding of the 3-wide output projection

# When True, both MXU matmuls of the head run in bf16 with f32 accumulation
# (2-4x MXU throughput on v5e/v6e/v7x at production H=256). Left False by
# default for exact parity with the torch float32 nn.Linear reference.
USE_BF16_MATMUL = False


# ----------------------------------------------------------------------------
# tile pickers
# ----------------------------------------------------------------------------
def _pick_row_tile(m):
    """Row tile for the MLP: one step for small M, >=2 steps (v7x megacore)
    and <=512 rows/step for large M, tile a multiple of 8."""
    if m <= 128:
        return m
    cap = min(512, m // 2)
    t = cap - cap % 8
    while t >= 64:
        if m % t == 0:
            return t
        t -= 8
    return m


def _pick_seq_tile(l, cap=256):
    """Sequence tile for the loss kernel: multiple of 128 (lane axis), capped
    at 256 (safe for v7x's 64 MiB VMEM), whole sequence if it is small or has
    no nice divisor."""
    if l <= cap:
        return l
    t = (cap // 128) * 128
    while t >= 128:
        if l % t == 0:
            return t
        t -= 128
    return l


# ----------------------------------------------------------------------------
# Kernel 1: prediction head MLP  (Linear(H,3H) -> GELU(exact) -> Linear(3H,3))
#           w2/b2 arrive zero-padded to OUT_PAD lanes -> lane-dense stores.
#           The first mask_hidden_state multiply is fused into the store.
# ----------------------------------------------------------------------------
def _mlp_head_kernel(x_ref, m_ref, w1_ref, b1_ref, w2_ref, b2_ref, o_ref):
    x = x_ref[...]                                                     # (TM, H)
    h = jnp.dot(x, w1_ref[...], preferred_element_type=jnp.float32) + b1_ref[...]
    # exact (erf-based) GELU, matching torch.nn.GELU() default.
    # (tanh-approx GELU would move this to the EUP slot; kept exact for parity)
    h = 0.5 * h * (1.0 + jax.lax.erf(h * 0.7071067811865475))
    w2 = w2_ref[...]
    o = jnp.dot(h.astype(w2.dtype), w2, preferred_element_type=jnp.float32) + b2_ref[...]
    # fused first mask_hidden_state: zero padded rows before the store
    o_ref[...] = o * m_ref[...]                                        # (TM, OUT_PAD)


def mlp_head(x2d, mask2d, w1, b1, w2p, b2p, tm=None):
    m, h_dim = x2d.shape
    h3 = w1.shape[1]
    if tm is None:
        tm = _pick_row_tile(m)
    assert m % tm == 0, "row count must be divisible by the row tile"
    return pl.pallas_call(
        _mlp_head_kernel,
        out_shape=jax.ShapeDtypeStruct((m, OUT_PAD), jnp.float32),
        grid=(m // tm,),
        in_specs=[
            pl.BlockSpec((tm, h_dim), lambda i: (i, 0)),
            pl.BlockSpec((tm, 1), lambda i: (i, 0)),
            pl.BlockSpec((h_dim, h3), lambda i: (0, 0)),     # weights stay resident
            pl.BlockSpec((1, h3), lambda i: (0, 0)),
            pl.BlockSpec((h3, OUT_PAD), lambda i: (0, 0)),
            pl.BlockSpec((1, OUT_PAD), lambda i: (0, 0)),
        ],
        out_specs=pl.BlockSpec((tm, OUT_PAD), lambda i: (i, 0)),
        compiler_params=pltpu.CompilerParams(
            dimension_semantics=("parallel",)),      # shards rows across v7x's 2 TCs
    )(x2d, mask2d, w1, b1, w2p, b2p)


# ----------------------------------------------------------------------------
# Kernel 2: loss computation over a triangular (i <= j) tiling of the L x L
# distance matrix. i-block operands are (B, TI, 3) (L on sublanes), j-block
# operands are (B, 3, TJ) (L on lanes): the broadcast differences need no
# in-kernel relayout. Accumulators are lane-shaped; cross-lane reductions
# happen exactly once (finalize).
# ----------------------------------------------------------------------------
def _loss_kernel(ii_ref, jj_ref,
                 ci_ref, hi_ref, mi_ref, cj_ref, hj_ref, mj_ref,
                 mae_ref, mse_ref, rmsd_ref,
                 s_mae, s_mse, s_msk, s_dl2, s_mb):
    t = pl.program_id(0)
    nt = pl.num_programs(0)
    ii = ii_ref[t]
    jj = jj_ref[t]

    @pl.when(t == 0)
    def _init():
        s_mae[...] = jnp.zeros_like(s_mae)
        s_mse[...] = jnp.zeros_like(s_mse)
        s_msk[...] = jnp.zeros_like(s_msk)
        s_dl2[...] = jnp.zeros_like(s_dl2)
        s_mb[...] = jnp.zeros_like(s_mb)

    ci = ci_ref[...]            # (B, TI, 3)  raw conformer, i-block (sublane-major)
    hi = hi_ref[...]            # (B, TI, 3)  masked conformer_hat, i-block
    mi = mi_ref[...]            # (B, TI, 1)
    cj = cj_ref[...]            # (B, 3, TJ)  raw conformer, j-block (lane-major)
    hj = hj_ref[...]            # (B, 3, TJ)
    mj = mj_ref[...]            # (B, TJ)

    def pdist_block(xi, xj):
        # sum of three broadcast-difference squares (pure VPU work, no relayout:
        # xi slice broadcasts along lanes, xj slice broadcasts along sublanes)
        d2 = None
        for k in range(3):
            dk = xi[:, :, k:k + 1] - xj[:, k:k + 1, :]     # (B, TI, TJ)
            d2 = dk * dk if d2 is None else d2 + dk * dk
        return jnp.sqrt(jnp.maximum(d2, 0.0))
        # TODO(synk): add eps / exclude diagonal if a backward pass is ever
        # needed (sqrt gradient is infinite at d2 == 0).

    cmask = mi * mj[:, None, :]                            # (B, TI, TJ)
    diff = (pdist_block(ci, cj) - pdist_block(hi, hj)) * cmask

    # off-diagonal tiles stand in for their mirror image -> weight 2
    w = 2.0 - (ii == jj).astype(jnp.float32)

    # lane-preserving partial sums: sublane (TI-axis) reduce only per tile
    s_mae[...] += w * jnp.sum(jnp.abs(diff), axis=1)       # (B, TJ)
    s_mse[...] += w * jnp.sum(diff * diff, axis=1)         # (B, TJ)
    s_msk[...] += w * jnp.sum(cmask, axis=1)               # (B, TJ)

    # RMSD partials depend only on the i-block; each i-block appears exactly
    # once as a diagonal tile of the triangular schedule.
    @pl.when(ii == jj)
    def _rmsd_partial():
        delta = ci - hi                                    # (B, TI, 3)
        # NOTE: matches the torch reference, which does NOT mask the RMSD
        # numerator (padded rows contribute |conformer|^2) while the
        # denominator counts only valid rows.
        s_dl2[...] += jnp.sum(delta * delta, axis=1)       # (B, 3)
        s_mb[...] += jnp.sum(mi, axis=1)                   # (B, 1)

    @pl.when(t == nt - 1)
    def _finalize():
        denom = jnp.sum(s_msk[...])                        # single cross-lane reduce
        mae_ref[...] = jnp.full((1, 1), jnp.sum(s_mae[...]) / denom, jnp.float32)
        mse_ref[...] = jnp.full((1, 1), jnp.sum(s_mse[...]) / denom, jnp.float32)
        msd = jnp.sum(s_dl2[...], axis=1, keepdims=True) / s_mb[...]   # (B, 1)
        rmsd_ref[...] = jnp.full((1, 1), jnp.mean(jnp.sqrt(msd)), jnp.float32)


def compute_losses(conformer, conformer_hat, padding_mask, tile=None):
    b, l, _ = conformer.shape
    conf_i = conformer.astype(jnp.float32)                 # (B, L, 3): L on sublanes
    hat_i = conformer_hat.astype(jnp.float32)
    conf_j = jnp.transpose(conf_i, (0, 2, 1))              # (B, 3, L): L on lanes
    hat_j = jnp.transpose(hat_i, (0, 2, 1))
    mask = padding_mask.astype(jnp.float32)                # (B, L)
    mask_i = mask[..., None]                               # (B, L, 1)

    if tile is None:
        tile = _pick_seq_tile(l)
    assert l % tile == 0
    nb = l // tile

    # triangular (i <= j) tile schedule fed via scalar prefetch: ~2x fewer
    # grid steps than the full (nb x nb) grid at large L.
    pairs = [(i, j) for i in range(nb) for j in range(i, nb)]
    ii = jnp.asarray([p[0] for p in pairs], dtype=jnp.int32)
    jj = jnp.asarray([p[1] for p in pairs], dtype=jnp.int32)
    n_tiles = len(pairs)

    scalar = jax.ShapeDtypeStruct((1, 1), jnp.float32)
    grid_spec = pltpu.PrefetchScalarGridSpec(
        num_scalar_prefetch=2,
        grid=(n_tiles,),
        in_specs=[
            pl.BlockSpec((b, tile, 3), lambda t, ib, jb: (0, ib[t], 0)),
            pl.BlockSpec((b, tile, 3), lambda t, ib, jb: (0, ib[t], 0)),
            pl.BlockSpec((b, tile, 1), lambda t, ib, jb: (0, ib[t], 0)),
            pl.BlockSpec((b, 3, tile), lambda t, ib, jb: (0, 0, jb[t])),
            pl.BlockSpec((b, 3, tile), lambda t, ib, jb: (0, 0, jb[t])),
            pl.BlockSpec((b, tile), lambda t, ib, jb: (0, jb[t])),
        ],
        out_specs=(
            pl.BlockSpec((1, 1), lambda t, ib, jb: (0, 0)),
            pl.BlockSpec((1, 1), lambda t, ib, jb: (0, 0)),
            pl.BlockSpec((1, 1), lambda t, ib, jb: (0, 0)),
        ),
        scratch_shapes=[
            pltpu.VMEM((b, tile), jnp.float32),   # sum |d - dh| * mask (lane-shaped)
            pltpu.VMEM((b, tile), jnp.float32),   # sum (d - dh)^2 * mask
            pltpu.VMEM((b, tile), jnp.float32),   # sum mask
            pltpu.VMEM((b, 3), jnp.float32),      # per-batch sum ||delta||^2 per coord
            pltpu.VMEM((b, 1), jnp.float32),      # per-batch sum mask
        ],
    )
    # TODO(synk): v7x-only ~2x more available by emitting per-i partial outputs
    # and marking the axis "parallel"; the scratch accumulators + triangular
    # schedule used here require sequential ("arbitrary") execution.
    mae, mse, rmsd = pl.pallas_call(
        _loss_kernel,
        out_shape=(scalar, scalar, scalar),
        grid_spec=grid_spec,
        compiler_params=pltpu.CompilerParams(
            dimension_semantics=("arbitrary",)),
    )(ii, jj, conf_i, hat_i, mask_i, conf_j, hat_j, mask)
    return mae, mse, rmsd


# ----------------------------------------------------------------------------
# Glue: masked Kabsch alignment of conformer_hat onto conformer.
# TODO(synk): source of `align_conformer_hat_to_conformer` not provided;
#             assumed to be masked rigid (Kabsch) superposition. The batched
#             3x3 SVD has no clean Pallas equivalent, so it stays in plain JAX.
# ----------------------------------------------------------------------------
def kabsch_align(hat, conf, mask):
    w = mask[..., None]                                                # (B, L, 1)
    n = jnp.sum(mask, axis=-1)[:, None, None]                          # (B, 1, 1)
    mu_h = jnp.sum(hat * w, axis=1, keepdims=True) / n
    mu_c = jnp.sum(conf * w, axis=1, keepdims=True) / n
    hc = (hat - mu_h) * w
    cc = (conf - mu_c) * w
    Hm = jnp.einsum('bli,blj->bij', hc, cc)                            # (B, 3, 3)
    U, _, Vt = jnp.linalg.svd(Hm)
    V = jnp.swapaxes(Vt, -1, -2)
    Ut = jnp.swapaxes(U, -1, -2)
    d = jnp.sign(jnp.linalg.det(jnp.einsum('bij,bjk->bik', V, Ut)))
    D = jnp.stack([jnp.ones_like(d), jnp.ones_like(d), d], axis=-1)    # (B, 3)
    R = jnp.einsum('bij,bj,bjk->bik', V, D, Ut)                        # rotation
    aligned = jnp.einsum('bli,bki->blk', hat - mu_h, R) + mu_c
    return aligned


# ----------------------------------------------------------------------------
# Full forward pass (mirrors ConformerPredictionHead.forward)
# ----------------------------------------------------------------------------
def conformer_prediction_head(conformer, hidden_X, padding_mask, params,
                              compute_loss=True):
    b, l, h_dim = hidden_X.shape
    if padding_mask is None:
        padding_mask = jnp.ones((b, l), jnp.float32)
    padding_mask = padding_mask.astype(jnp.float32)

    w1, b1, w2, b2 = params['w1'], params['b1'], params['w2'], params['b2']

    # lane-dense output: zero-pad the 3-wide projection to OUT_PAD lanes
    w2p = jnp.zeros((w2.shape[0], OUT_PAD), jnp.float32).at[:, :3].set(w2)
    b2p = jnp.zeros((1, OUT_PAD), jnp.float32).at[:, :3].set(b2)

    if USE_BF16_MATMUL:
        # direct bf16 cast of the activation (no f32 round trip); both matmuls
        # run bf16 x bf16 -> f32 accumulate inside the kernel.
        x2d = hidden_X.reshape(b * l, h_dim).astype(jnp.bfloat16)
        w1 = w1.astype(jnp.bfloat16)
        w2p = w2p.astype(jnp.bfloat16)
    else:
        x2d = hidden_X.reshape(b * l, h_dim).astype(jnp.float32)

    mask2d = padding_mask.reshape(b * l, 1)                            # fused in-kernel

    out_pad = mlp_head(x2d, mask2d, w1, b1, w2p, b2p)                  # (B*L, OUT_PAD)
    hat = out_pad[:, :3].reshape(b, l, 3)                              # mask #1 already applied
    hat = kabsch_align(hat, conformer, padding_mask)
    hat = hat * padding_mask[..., None]                                # mask_hidden_state #2

    if not compute_loss:
        return hat

    mae, mse, rmsd = compute_losses(conformer, hat, padding_mask)
    mae, mse, rmsd = mae[0, 0], mse[0, 0], rmsd[0, 0]
    return {
        'loss': mae,
        'cdist_mae': mae,
        'cdist_mse': mse,
        'coord_rmsd': rmsd,
        'conformer': conformer,
        'conformer_hat': hat,
    }


if __name__ == "__main__":
    key = jax.random.PRNGKey(0)
    k1, k2, k3, k4, k5, k6 = jax.random.split(key, 6)

    H = HIDDEN
    # deterministic parameter init (PyTorch-style uniform bounds), layout (in, out)
    bound1 = 1.0 / (H ** 0.5)
    bound2 = 1.0 / ((3 * H) ** 0.5)
    params = {
        'w1': jax.random.uniform(k1, (H, 3 * H), jnp.float32, -bound1, bound1),
        'b1': jax.random.uniform(k2, (1, 3 * H), jnp.float32, -bound1, bound1),
        'w2': jax.random.uniform(k3, (3 * H, 3), jnp.float32, -bound2, bound2),
        'b2': jax.random.uniform(k4, (1, 3), jnp.float32, -bound2, bound2),
    }

    conformer = jax.random.normal(k5, (B, L, 3), jnp.float32)
    hidden_X = jax.random.normal(k6, (B, L, H), jnp.float32)
    # 1.0 = valid, 0.0 = padded; last two positions of each sequence padded
    padding_mask = jnp.concatenate(
        [jnp.ones((B, L - 2), jnp.float32), jnp.zeros((B, 2), jnp.float32)], axis=1)

    out = conformer_prediction_head(conformer, hidden_X, padding_mask, params,
                                    compute_loss=True)
    jax.block_until_ready(out)
    print("KERNEL_OK")
</pallas_src>

<mosaic_0001>
module attributes {stable_mosaic.version = 11 : i64} {
  func.func @_mlp_head_kernel(%arg0: i32, %arg1: memref<16x32xf32, #tpu.memory_space<vmem>>, %arg2: memref<16x1xf32, #tpu.memory_space<vmem>>, %arg3: memref<32x96xf32, #tpu.memory_space<vmem>>, %arg4: memref<1x96xf32, #tpu.memory_space<vmem>>, %arg5: memref<96x128xf32, #tpu.memory_space<vmem>>, %arg6: memref<1x128xf32, #tpu.memory_space<vmem>>, %arg7: memref<16x128xf32, #tpu.memory_space<vmem>>) attributes {dimension_semantics = [#tpu.dimension_semantics<parallel>], iteration_bounds = array<i64: 1>, scalar_prefetch = 0 : i64, scratch_operands = 0 : i64, tpu.core_type = #tpu.core_type<tc>, window_params = [{transform_indices = @transform_0, window_bounds = array<i64: 16, 32>}, {transform_indices = @transform_1, window_bounds = array<i64: 16, 1>}, {pipeline_mode = #tpu.pipeline_mode<synchronous>, transform_indices = @transform_2, window_bounds = array<i64: 32, 96>}, {pipeline_mode = #tpu.pipeline_mode<synchronous>, transform_indices = @transform_3, window_bounds = array<i64: 1, 96>}, {pipeline_mode = #tpu.pipeline_mode<synchronous>, transform_indices = @transform_4, window_bounds = array<i64: 96, 128>}, {pipeline_mode = #tpu.pipeline_mode<synchronous>, transform_indices = @transform_5, window_bounds = array<i64: 1, 128>}, {transform_indices = @transform_6, window_bounds = array<i64: 16, 128>}]} {
    %c0 = arith.constant 0 : index
    %c0_0 = arith.constant 0 : index
    %0 = vector.load %arg1[%c0, %c0_0] : memref<16x32xf32, #tpu.memory_space<vmem>>, vector<16x32xf32>
    %c0_1 = arith.constant 0 : index
    %c0_2 = arith.constant 0 : index
    %1 = vector.load %arg3[%c0_1, %c0_2] : memref<32x96xf32, #tpu.memory_space<vmem>>, vector<32x96xf32>
    %cst = arith.constant dense<0.000000e+00> : vector<16x96xf32>
    %2 = tpu.matmul %0, %1, %cst {dimension_numbers = #tpu.dot_dimension_numbers<[1], [0], [0], [1], [0, 0, 1, 1], [], []>} : vector<16x32xf32>, vector<32x96xf32>, vector<16x96xf32> -> vector<16x96xf32>
    %c0_3 = arith.constant 0 : index
    %c0_4 = arith.constant 0 : index
    %3 = vector.load %arg4[%c0_3, %c0_4] : memref<1x96xf32, #tpu.memory_space<vmem>>, vector<1x96xf32>
    %4 = vector.broadcast %3 : vector<1x96xf32> to vector<16x96xf32>
    %5 = arith.addf %2, %4 : vector<16x96xf32>
    %cst_5 = arith.constant 5.000000e-01 : f32
    %6 = vector.broadcast %cst_5 : f32 to vector<16x96xf32>
    %7 = arith.mulf %6, %5 : vector<16x96xf32>
    %cst_6 = arith.constant 0.707106769 : f32
    %8 = vector.broadcast %cst_6 : f32 to vector<16x96xf32>
    %9 = arith.mulf %5, %8 : vector<16x96xf32>
    %10 = math.erf %9 : vector<16x96xf32>
    %cst_7 = arith.constant 1.000000e+00 : f32
    %11 = vector.broadcast %cst_7 : f32 to vector<16x96xf32>
    %12 = arith.addf %11, %10 : vector<16x96xf32>
    %13 = arith.mulf %7, %12 : vector<16x96xf32>
    %c0_8 = arith.constant 0 : index
    %c0_9 = arith.constant 0 : index
    %14 = vector.load %arg5[%c0_8, %c0_9] : memref<96x128xf32, #tpu.memory_space<vmem>>, vector<96x128xf32>
    %cst_10 = arith.constant dense<0.000000e+00> : vector<16x128xf32>
    %15 = tpu.matmul %13, %14, %cst_10 {dimension_numbers = #tpu.dot_dimension_numbers<[1], [0], [0], [1], [0, 0, 1, 1], [], []>} : vector<16x96xf32>, vector<96x128xf32>, vector<16x128xf32> -> vector<16x128xf32>
    %c0_11 = arith.constant 0 : index
    %c0_12 = arith.constant 0 : index
    %16 = vector.load %arg6[%c0_11, %c0_12] : memref<1x128xf32, #tpu.memory_space<vmem>>, vector<1x128xf32>
    %17 = vector.broadcast %16 : vector<1x128xf32> to vector<16x128xf32>
    %18 = arith.addf %15, %17 : vector<16x128xf32>
    %c0_13 = arith.constant 0 : index
    %c0_14 = arith.constant 0 : index
    %19 = vector.load %arg2[%c0_13, %c0_14] : memref<16x1xf32, #tpu.memory_space<vmem>>, vector<16x1xf32>
    %20 = vector.broadcast %19 : vector<16x1xf32> to vector<16x128xf32>
    %21 = arith.mulf %18, %20 : vector<16x128xf32>
    %c0_15 = arith.constant 0 : index
    %c0_16 = arith.constant 0 : index
    %22 = vector.load %arg7[%c0_15, %c0_16] : memref<16x128xf32, #tpu.memory_space<vmem>>, vector<16x128xf32>
    tpu.vector_store %arg7[%c0_15, %c0_16], %21 {strides = array<i32>} : memref<16x128xf32, #tpu.memory_space<vmem>>, vector<16x128xf32>,
    return
  }
  func.func @transform_0(%arg0: i32) -> (i32, i32) {
    %c0_i32 = arith.constant 0 : i32
    %c0_i32_0 = arith.constant 0 : i32
    return %arg0, %c0_i32 : i32, i32
  }
  func.func @transform_1(%arg0: i32) -> (i32, i32) {
    %c0_i32 = arith.constant 0 : i32
    %c0_i32_0 = arith.constant 0 : i32
    return %arg0, %c0_i32 : i32, i32
  }
  func.func @transform_2(%arg0: i32) -> (i32, i32) {
    %c0_i32 = arith.constant 0 : i32
    %c0_i32_0 = arith.constant 0 : i32
    %c0_i32_1 = arith.constant 0 : i32
    return %c0_i32, %c0_i32_0 : i32, i32
  }
  func.func @transform_3(%arg0: i32) -> (i32, i32) {
    %c0_i32 = arith.constant 0 : i32
    %c0_i32_0 = arith.constant 0 : i32
    %c0_i32_1 = arith.constant 0 : i32
    return %c0_i32, %c0_i32_0 : i32, i32
  }
  func.func @transform_4(%arg0: i32) -> (i32, i32) {
    %c0_i32 = arith.constant 0 : i32
    %c0_i32_0 = arith.constant 0 : i32
    %c0_i32_1 = arith.constant 0 : i32
    return %c0_i32, %c0_i32_0 : i32, i32
  }
  func.func @transform_5(%arg0: i32) -> (i32, i32) {
    %c0_i32 = arith.constant 0 : i32
    %c0_i32_0 = arith.constant 0 : i32
    %c0_i32_1 = arith.constant 0 : i32
    return %c0_i32, %c0_i32_0 : i32, i32
  }
  func.func @transform_6(%arg0: i32) -> (i32, i32) {
    %c0_i32 = arith.constant 0 : i32
    %c0_i32_0 = arith.constant 0 : i32
    return %arg0, %c0_i32 : i32, i32
  }
}

</mosaic_0001>

<llo_original>
// kernel: tpu_custom_call.1
$region0: #{tpu_custom_call.1}
  #allocation0 [shape = 'u32[]', space=smem, size = 0x4, offset = 0x4, fixed_abs, tag = 'smem constant byte address 0x4 - core index']
  #allocation1 [shape = 'u32[144,128]{1,0:T(1,128)}', space=vmem, size = 0x12000, scoped, tag = 'internal scratch']
  %s0 = inlined_call_operand.vmem [shape: f32[16,32], index: 0, kind: input, shape index: {}]
  %s1 = inlined_call_operand.vmem [shape: f32[16,1], index: 1, kind: input, shape index: {}]
  %s2 = inlined_call_operand.hbm [shape: f32[32,96], index: 2, kind: input, shape index: {}]
  %s3 = inlined_call_operand.vmem [shape: f32[1,96], index: 3, kind: input, shape index: {}]
  %s4 = inlined_call_operand.hbm [shape: f32[96,128], index: 4, kind: input, shape index: {}]
  %s5 = inlined_call_operand.vmem [shape: f32[1,128], index: 5, kind: input, shape index: {}]
  %s6 = inlined_call_operand.hbm [shape: f32[16,128], index: 6, kind: output, shape index: {}]
  %s7 = sld [smem:[#allocation0]]
  $region42: #{tpu_custom_call.1} parent=0
    _
  %s9 = ssub.s32 1, %s7
  %s10 = scalar_select 0, %s9, %s7
  $region1: #{tpu_custom_call.1} parent=0
    #allocation2 [shape = 'u8[16384]{0}', space=vmem, size = 0x4000, scoped, tag = 'input window, operand 2, single buffered']
    #allocation3 [shape = 's32[1]{0}', space=sflag, size = 0x4, scoped, tag = 'scoped memory for tpu_custom_call.1']
    #allocation4 [shape = 's32[1]{0}', space=sflag, size = 0x4, scoped, tag = 'scoped memory for tpu_custom_call.1']
    #allocation5 [shape = 'u8[49152]{0}', space=vmem, size = 0xc000, scoped, tag = 'input window, operand 4, single buffered']
    #allocation6 [shape = 's32[1]{0}', space=sflag, size = 0x4, scoped, tag = 'scoped memory for tpu_custom_call.1']
    #allocation7 [shape = 'u8[8192]{0}', space=vmem, size = 0x2000, scoped, tag = 'output window, operand 0, single buffered']
    %11 = vsyncpa [#allocation3], 0
    %12 = vsyncpa [#allocation6], 0
    %13 = vsyncpa [#allocation4], 0
    // Predicated region
    $region2: #{tpu_custom_call.1} parent=1 // pred_check
      _
    $region3: #{tpu_custom_call.1} parent=1 // pred_check_branch
      %15 = sbr.rel (0) target = $region5
    $region4: #{tpu_custom_call.1} parent=1 // pred_region
      _
    $region5: #{tpu_custom_call.1} parent=1 // pred_fallthru
      _
    // Predicated region
    $region6: #{tpu_custom_call.1} parent=1 // pred_check
      _
    $region7: #{tpu_custom_call.1} parent=1 // pred_check_branch
      %17 = sbr.rel (0) target = $region9
    $region8: #{tpu_custom_call.1} parent=1 // pred_region
      _
    $region9: #{tpu_custom_call.1} parent=1 // pred_fallthru
      _
    // Predicated region
    $region10: #{tpu_custom_call.1} parent=1 // pred_check
      _
    $region11: #{tpu_custom_call.1} parent=1 // pred_check_branch
      %19 = sbr.rel (0) target = $region13
    $region12: #{tpu_custom_call.1} parent=1 // pred_region
      %s21 = ssub.s32 512, 512
      %22 = vsyncadd [#allocation3], %s21
      %s23 = sshll.u32 [#allocation2], 4
      %s24 = int_to_ptr.vmem [resolvable:$true] %s23
      %29 = dma.hbm_to_vmem [thread:$0]  %s2, 512, %s24, [#allocation3], 128, 128, 8
    $region13: #{tpu_custom_call.1} parent=1 // pred_fallthru
      _
    // Predicated region
    $region14: #{tpu_custom_call.1} parent=1 // pred_check
      _
    $region15: #{tpu_custom_call.1} parent=1 // pred_check_branch
      %31 = sbr.rel (0) target = $region17
    $region16: #{tpu_custom_call.1} parent=1 // pred_region
      _
    $region17: #{tpu_custom_call.1} parent=1 // pred_fallthru
      _
    // Predicated region
    $region18: #{tpu_custom_call.1} parent=1 // pred_check
      _
    $region19: #{tpu_custom_call.1} parent=1 // pred_check_branch
      %33 = sbr.rel (0) target = $region21
    $region20: #{tpu_custom_call.1} parent=1 // pred_region
      %s35 = ssub.s32 1536, 1536
      %36 = vsyncadd [#allocation6], %s35
      %s37 = sshll.u32 [#allocation5], 4
      %s38 = int_to_ptr.vmem [resolvable:$true] %s37
      %43 = dma.hbm_to_vmem [thread:$0]  %s4, 1536, %s38, [#allocation6], 128, 128, 8
    $region21: #{tpu_custom_call.1} parent=1 // pred_fallthru
      _
    // Predicated region
    $region22: #{tpu_custom_call.1} parent=1 // pred_check
      _
    $region23: #{tpu_custom_call.1} parent=1 // pred_check_branch
      %45 = sbr.rel (0) target = $region25
    $region24: #{tpu_custom_call.1} parent=1 // pred_region
      _
    $region25: #{tpu_custom_call.1} parent=1 // pred_fallthru
      _
    // Predicated region
    $region26: #{tpu_custom_call.1} parent=1 // pred_check
      _
    $region27: #{tpu_custom_call.1} parent=1 // pred_check_branch
      %47 = sbr.rel (0) target = $region29
    $region28: #{tpu_custom_call.1} parent=1 // pred_region
      %48 = dma.done [#allocation3], 512
    $region29: #{tpu_custom_call.1} parent=1 // pred_fallthru
      _
    // Predicated region
    $region30: #{tpu_custom_call.1} parent=1 // pred_check
      _
    $region31: #{tpu_custom_call.1} parent=1 // pred_check_branch
      %50 = sbr.rel (0) target = $region33
    $region32: #{tpu_custom_call.1} parent=1 // pred_region
      %51 = dma.done [#allocation6], 1536
    $region33: #{tpu_custom_call.1} parent=1 // pred_fallthru
      _
    %v52 = vld [vmem:[%s0] sm:$0xff]
    %v53 = vld [vmem:[%s0 + $0x8] sm:$0xff]
    %v54 = vld [vmem:[#allocation2] sm:$0xff]
    %v55 = vld [vmem:[#allocation2 + $0x8] sm:$0xff]
    %v56 = vld [vmem:[#allocation2 + $0x10] sm:$0xff]
    %v57 = vld [vmem:[#allocation2 + $0x18] sm:$0xff]
    %v58 = vld [vmem:[%s3] sm:$0x1]
    %v60 = vlaneseq
    %v61 = vshrl.u32 %v60, 7
    %v62 = vsub.s32 0, %v61
    %v63 = vrot.slane %v58, %v62
    %vm65 = vcmask 261120
    %v67 = vsel %vm65, %v52, 0
    %v70 = vsel %vm65, %v53, 0
    %72 = vmatprep.subr.mxu0 0.0
    %73 = vmatpush1.msra.mxu0 %v54
    %74 = vmatprep.subr.mxu0 0.0
    %75 = vmatpush1.msra.mxu0 %v55
    %76 = vmatprep.subr.mxu0 0.0
    %77 = vmatpush1.msra.mxu0 %v56
    %78 = vmatprep.subr.mxu0 0.0
    %79 = vmatpush1.msra.mxu0 %v57
    %80 = vmatprep.subr.mxu0 0.0
    %81 = vmatpush1.msra.mxu0 0.0
    %82 = vmatprep.subr.mxu0 0.0
    %83 = vmatpush1.msra.mxu0 0.0
    %84 = vmatprep.subr.mxu0 0.0
    %85 = vmatpush1.msra.mxu0 0.0
    %86 = vmatprep.subr.mxu0 0.0
    %87 = vmatpush1.msra.mxu0 0.0
    %88 = vmatprep.subr.mxu0 0.0
    %89 = vmatpush1.msra.mxu0 0.0
    %90 = vmatprep.subr.mxu0 0.0
    %91 = vmatpush1.msra.mxu0 0.0
    %92 = vmatprep.subr.mxu0 0.0
    %93 = vmatpush1.msra.mxu0 0.0
    %94 = vmatprep.subr.mxu0 0.0
    %95 = vmatpush1.msra.mxu0 0.0
    %96 = vmatprep.subr.mxu0 0.0
    %97 = vmatpush1.msra.mxu0 0.0
    %98 = vmatprep.subr.mxu0 0.0
    %99 = vmatpush1.msra.mxu0 0.0
    %100 = vmatprep.subr.mxu0 0.0
    %101 = vmatpush1.msra.mxu0 0.0
    %102 = vmatprep.subr.mxu0 0.0
    %103 = vmatpush1.msra.mxu0 0.0
    %104 = vmatprep.subr.mxu0 0.0
    %105 = vmatpush1.msra.mxu0 0.0
    %106 = vmatprep.subr.mxu0 0.0
    %107 = vmatpush1.msra.mxu0 0.0
    %108 = vmatprep.subr.mxu0 0.0
    %109 = vmatpush1.msra.mxu0 0.0
    %110 = vmatprep.subr.mxu0 0.0
    %111 = vmatpush1.msra.mxu0 0.0
    %112 = vmatprep.subr.mxu0 0.0
    %113 = vmatpush1.msra.mxu0 0.0
    %114 = vmatprep.subr.mxu0 0.0
    %115 = vmatpush1.msra.mxu0 0.0
    %116 = vmatprep.subr.mxu0 0.0
    %117 = vmatpush1.msra.mxu0 0.0
    %118 = vmatprep.subr.mxu0 0.0
    %119 = vmatpush1.msra.mxu0 0.0
    %120 = vmatprep.subr.mxu0 0.0
    %121 = vmatpush1.msra.mxu0 0.0
    %122 = vmatprep.subr.mxu0 0.0
    %123 = vmatpush1.msra.mxu0 0.0
    %124 = vmatprep.subr.mxu0 0.0
    %125 = vmatpush1.msra.mxu0 0.0
    %126 = vmatprep.subr.mxu0 0.0
    %127 = vmatpush1.msra.mxu0 0.0
    %128 = vmatprep.subr.mxu0 0.0
    %129 = vmatpush1.msra.mxu0 0.0
    %130 = vmatprep.subr.mxu0 0.0
    %131 = vmatpush1.msra.mxu0 0.0
    %132 = vmatprep.subr.mxu0 0.0
    %133 = vmatpush1.msra.mxu0 0.0
    %134 = vmatprep.subr.mxu0 0.0
    %135 = vmatpush1.msra.mxu0 0.0
    %136 = vmatprep.mubr.f32.mxu0 0.0
    %137 = vmatmul.mubr.f32.gmra.mrb[0].mxu0 %v67
    %v138 = vpop.f32.mrb[0].mxu0
    %v139 = vadd.f32 %v63, %v138
    %v140 = vpop.f32.mrb[0].mxu0
    %141 = vmatprep.mubr.f32.mxu0 0.0
    %142 = vmatmul.mubr.f32.gmra.mrb[0].mxu0 %v70
    %v143 = vpop.f32.mrb[0].mxu0
    %v144 = vadd.f32 %v63, %v143
    %v145 = vpop.f32.mrb[0].mxu0
    %146 = vdwg.mxu0
    %v147 = vmul.f32 %v139, 0.5
    %v148 = vmul.f32 %v144, 0.5
    %v149 = vmul.f32 %v139, 0.70710677
    %v150 = vmul.f32 %v144, 0.70710677
    %v151 = verf.f32.pop %v149
    %v152 = verf.f32.pop %v150
    %v153 = vadd.f32 %v151, 1.0
    %v154 = vadd.f32 %v152, 1.0
    %v155 = vmul.f32 %v147, %v153
    %v156 = vmul.f32 %v148, %v154
    %v157 = vld [vmem:[#allocation5] sm:$0xff]
    %v158 = vld [vmem:[#allocation5 + $0x8] sm:$0xff]
    %v159 = vld [vmem:[#allocation5 + $0x10] sm:$0xff]
    %v160 = vld [vmem:[#allocation5 + $0x18] sm:$0xff]
    %v161 = vld [vmem:[#allocation5 + $0x20] sm:$0xff]
    %v162 = vld [vmem:[#allocation5 + $0x28] sm:$0xff]
    %v163 = vld [vmem:[#allocation5 + $0x30] sm:$0xff]
    %v164 = vld [vmem:[#allocation5 + $0x38] sm:$0xff]
    %v165 = vld [vmem:[#allocation5 + $0x40] sm:$0xff]
    %v166 = vld [vmem:[#allocation5 + $0x48] sm:$0xff]
    %v167 = vld [vmem:[#allocation5 + $0x50] sm:$0xff]
    %v168 = vld [vmem:[#allocation5 + $0x58] sm:$0xff]
    %v169 = vld [vmem:[%s5] sm:$0x1]
    %v171 = vlaneseq
    %v172 = vshrl.u32 %v171, 7
    %v173 = vsub.s32 0, %v172
    %v174 = vrot.slane %v169, %v173
    %vm176 = vcmask 785408
    %v178 = vsel %vm176, %v155, 0
    %v181 = vsel %vm176, %v156, 0
    %183 = vmatprep.subr.mxu0 0.0
    %184 = vmatpush1.msra.mxu0 %v157
    %185 = vmatprep.subr.mxu0 0.0
    %186 = vmatpush1.msra.mxu0 %v158
    %187 = vmatprep.subr.mxu0 0.0
    %188 = vmatpush1.msra.mxu0 %v159
    %189 = vmatprep.subr.mxu0 0.0
    %190 = vmatpush1.msra.mxu0 %v160
    %191 = vmatprep.subr.mxu0 0.0
    %192 = vmatpush1.msra.mxu0 %v161
    %193 = vmatprep.subr.mxu0 0.0
    %194 = vmatpush1.msra.mxu0 %v162
    %195 = vmatprep.subr.mxu0 0.0
    %196 = vmatpush1.msra.mxu0 %v163
    %197 = vmatprep.subr.mxu0 0.0
    %198 = vmatpush1.msra.mxu0 %v164
    %199 = vmatprep.subr.mxu0 0.0
    %200 = vmatpush1.msra.mxu0 %v165
    %201 = vmatprep.subr.mxu0 0.0
    %202 = vmatpush1.msra.mxu0 %v166
    %203 = vmatprep.subr.mxu0 0.0
    %204 = vmatpush1.msra.mxu0 %v167
    %205 = vmatprep.subr.mxu0 0.0
    %206 = vmatpush1.msra.mxu0 %v168
    %207 = vmatprep.subr.mxu0 0.0
    %208 = vmatpush1.msra.mxu0 0.0
    %209 = vmatprep.subr.mxu0 0.0
    %210 = vmatpush1.msra.mxu0 0.0
    %211 = vmatprep.subr.mxu0 0.0
    %212 = vmatpush1.msra.mxu0 0.0
    %213 = vmatprep.subr.mxu0 0.0
    %214 = vmatpush1.msra.mxu0 0.0
    %215 = vmatprep.subr.mxu0 0.0
    %216 = vmatpush1.msra.mxu0 0.0
    %217 = vmatprep.subr.mxu0 0.0
    %218 = vmatpush1.msra.mxu0 0.0
    %219 = vmatprep.subr.mxu0 0.0
    %220 = vmatpush1.msra.mxu0 0.0
    %221 = vmatprep.subr.mxu0 0.0
    %222 = vmatpush1.msra.mxu0 0.0
    %223 = vmatprep.subr.mxu0 0.0
    %224 = vmatpush1.msra.mxu0 0.0
    %225 = vmatprep.subr.mxu0 0.0
    %226 = vmatpush1.msra.mxu0 0.0
    %227 = vmatprep.subr.mxu0 0.0
    %228 = vmatpush1.msra.mxu0 0.0
    %229 = vmatprep.subr.mxu0 0.0
    %230 = vmatpush1.msra.mxu0 0.0
    %231 = vmatprep.subr.mxu0 0.0
    %232 = vmatpush1.msra.mxu0 0.0
    %233 = vmatprep.subr.mxu0 0.0
    %234 = vmatpush1.msra.mxu0 0.0
    %235 = vmatprep.subr.mxu0 0.0
    %236 = vmatpush1.msra.mxu0 0.0
    %237 = vmatprep.subr.mxu0 0.0
    %238 = vmatpush1.msra.mxu0 0.0
    %239 = vmatprep.subr.mxu0 0.0
    %240 = vmatpush1.msra.mxu0 0.0
    %241 = vmatprep.subr.mxu0 0.0
    %242 = vmatpush1.msra.mxu0 0.0
    %243 = vmatprep.subr.mxu0 0.0
    %244 = vmatpush1.msra.mxu0 0.0
    %245 = vmatprep.subr.mxu0 0.0
    %246 = vmatpush1.msra.mxu0 0.0
    %247 = vmatprep.mubr.f32.mxu0 0.0
    %248 = vmatmul.mubr.f32.gmra.mrb[0].mxu0 %v178
    %v249 = vpop.f32.mrb[0].mxu0
    %v250 = vadd.f32 %v174, %v249
    %v251 = vpop.f32.mrb[0].mxu0
    %252 = vmatprep.mubr.f32.mxu0 0.0
    %253 = vmatmul.mubr.f32.gmra.mrb[0].mxu0 %v181
    %v254 = vpop.f32.mrb[0].mxu0
    %v255 = vadd.f32 %v174, %v254
    %v256 = vpop.f32.mrb[0].mxu0
    %257 = vdwg.mxu0
    %v258 = vld [vmem:[%s1] sm:$0xff]
    %v259 = vld [vmem:[%s1 + $0x8] sm:$0xff]
    %261 = vset.pattern.permute.xlu0 0
    %262 = vperm.xlu0 %261, %v258
    %v263 = vpop.permute.xlu0 %262
    %266 = vset.pattern.permute.xlu0 0
    %267 = vperm.xlu0 %266, %v259
    %v268 = vpop.permute.xlu0 %267
    %v270 = vmul.f32 %v250, %v263
    %v271 = vmul.f32 %v255, %v268
    %272 = vst [vmem:[#allocation7] sm:$0xff] %v270
    %273 = vst [vmem:[#allocation7 + $0x8] sm:$0xff] %v271
    // Predicated region
    $region34: #{tpu_custom_call.1} parent=1 // pred_check
      _
    $region35: #{tpu_custom_call.1} parent=1 // pred_check_branch
      %275 = sbr.rel (0) target = $region37
    $region36: #{tpu_custom_call.1} parent=1 // pred_region
      %s277 = ssub.s32 256, 256
      %278 = vsyncadd [#allocation4], %s277
      %s279 = sshll.u32 [#allocation7], 4
      %s280 = int_to_ptr.vmem [resolvable:$true] %s279
      %285 = dma.vmem_to_hbm [thread:$0]  %s280, 256, %s6, [#allocation4], 128, 128, 8
    $region37: #{tpu_custom_call.1} parent=1 // pred_fallthru
      _
    // Predicated region
    $region38: #{tpu_custom_call.1} parent=1 // pred_check
      _
    $region39: #{tpu_custom_call.1} parent=1 // pred_check_branch
      %287 = sbr.rel (0) target = $region41
    $region40: #{tpu_custom_call.1} parent=1 // pred_region
      %288 = dma.done [#allocation4], 256
    $region41: #{tpu_custom_call.1} parent=1 // pred_fallthru
      _
    %289 = vsyncpa [#allocation3], 1
    %290 = vsyncpa [#allocation6], 1
    %291 = vsyncpa [#allocation4], 1

</llo_original>
